<compile_context>
chip_gen: v7x
topology: tpu7x:2x2x1
jax: 0.10.0
libtpu: 0.0.40
codegen_flags: <defaults>
</compile_context>

<pallas_src>
import functools
import math

import jax
import jax.numpy as jnp
from jax.experimental import pallas as pl
from jax.experimental.pallas import tpu as pltpu


def _level_params(h, w, level):
    """Kernel / stride / pad / output sizes exactly as in the PyTorch module."""
    kh, kw = math.ceil(h / level), math.ceil(w / level)
    ph = math.floor((kh * level - h + 1) / 2)
    pw = math.floor((kw * level - w + 1) / 2)
    oh = (h + 2 * ph - kh) // kh + 1  # stride == kernel size
    ow = (w + 2 * pw - kw) // kw + 1
    return kh, kw, ph, pw, oh, ow


def _spp_kernel(x_ref, *out_refs, level_params, pool_type):
    """x_ref: (TILE_B, H, W);  out_refs[l]: (TILE_B, oh_l * ow_l)."""
    _, h, w = x_ref.shape
    is_max = pool_type == "max_pool"
    for o_ref, (kh, kw, ph, pw, oh, ow) in zip(out_refs, level_params):
        inv_win = 1.0 / (kh * kw)  # count_include_pad=True divisor
        for oy in range(oh):
            y0 = max(0, oy * kh - ph)
            y1 = min(h, oy * kh - ph + kh)
            for ox in range(ow):
                x0 = max(0, ox * kw - pw)
                x1 = min(w, ox * kw - pw + kw)
                # Statically clamped window == implicit -inf / zero padding.
                win = x_ref[:, y0:y1, x0:x1]                    # (TILE_B, dy, dx)
                if is_max:
                    v = jnp.max(win, axis=-1)                   # lane reduce
                    v = jnp.max(v, axis=-1, keepdims=True)      # (TILE_B, 1)
                else:
                    v = jnp.sum(win.astype(jnp.float32), axis=-1)
                    v = jnp.sum(v, axis=-1, keepdims=True) * inv_win
                col = oy * ow + ox
                o_ref[:, col:col + 1] = v.astype(o_ref.dtype)


def _pick_tile_b(b, bytes_per_image, target_bytes=2 << 20):
    """Largest row tile with ~target_bytes per input block (multiple of 8)."""
    t = max(1, target_bytes // max(1, bytes_per_image))
    if t >= b:
        return b  # full-axis block is always a legal block shape
    return max(8, (t // 8) * 8)  # keep output block's 2nd-minor dim % 8 == 0


def spp_layer(x, num_levels=2, pool_type="max_pool"):
    """Pallas implementation of SPPLayer.forward (input is NCHW)."""
    n, c, h, w = x.shape
    b = n * c
    x3 = x.reshape(b, h, w)  # contiguous view of NCHW, no data movement

    params = tuple(_level_params(h, w, i + 1) for i in range(num_levels))
    for kh, kw, ph, pw, _, _ in params:
        if kh <= ph or kw <= pw:  # would create an all-padding window
            raise ValueError("padding exceeds half the kernel size (PyTorch rejects this too)")

    tile_b = _pick_tile_b(b, h * w * x.dtype.itemsize)
    grid = (pl.cdiv(b, tile_b),)

    out_shape = tuple(
        jax.ShapeDtypeStruct((b, oh * ow), x.dtype) for *_, oh, ow in params
    )
    out_specs = tuple(
        pl.BlockSpec((tile_b, oh * ow), lambda i: (i, 0)) for *_, oh, ow in params
    )
    kernel = functools.partial(_spp_kernel, level_params=params, pool_type=pool_type)

    outs = pl.pallas_call(
        kernel,
        out_shape=out_shape,
        grid=grid,
        in_specs=[pl.BlockSpec((tile_b, h, w), lambda i: (i, 0, 0))],
        out_specs=out_specs,
        compiler_params=pltpu.CompilerParams(dimension_semantics=("parallel",)),
    )(x3)

    # (b, oh*ow) -> (n, c*oh*ow) is a contiguous (free) reshape; concat is tiny.
    feats = [o.reshape(n, -1) for o in outs]
    return jnp.concatenate(feats, axis=1)


def _spp_reference(x, num_levels=2, pool_type="max_pool"):
    """Pure-JAX reference (pad-based, same math as torch pooling) for checks."""
    n, c, h, w = x.shape
    feats = []
    for i in range(num_levels):
        kh, kw, ph, pw, oh, ow = _level_params(h, w, i + 1)
        pad_val = -jnp.inf if pool_type == "max_pool" else 0.0
        xp = jnp.pad(x, ((0, 0), (0, 0), (ph, ph), (pw, pw)), constant_values=pad_val)
        xp = xp[:, :, : oh * kh, : ow * kw].reshape(n, c, oh, kh, ow, kw)
        if pool_type == "max_pool":
            t = xp.max(axis=(3, 5))
        else:
            t = xp.mean(axis=(3, 5))
        feats.append(t.reshape(n, -1))
    return jnp.concatenate(feats, axis=1)


if __name__ == "__main__":
    key = jax.random.PRNGKey(0)
    k0, k1 = jax.random.split(key)

    # Shape consistent with the module's forward: (num, c, h, w).
    x = jax.random.normal(k0, (2, 4, 16, 16), dtype=jnp.float32)

    out_max = jax.block_until_ready(spp_layer(x, num_levels=2, pool_type="max_pool"))
    ref_max = _spp_reference(x, num_levels=2, pool_type="max_pool")
    assert out_max.shape == (2, 4 * (1 + 4)), out_max.shape  # (N, C*(1+4)) = (2, 20)
    assert jnp.allclose(out_max, ref_max, atol=1e-5, rtol=1e-5)

    out_avg = jax.block_until_ready(spp_layer(x, num_levels=2, pool_type="avg_pool"))
    ref_avg = _spp_reference(x, num_levels=2, pool_type="avg_pool")
    assert jnp.allclose(out_avg, ref_avg, atol=1e-5, rtol=1e-5)

    # Odd spatial dims + 3 levels exercise the implicit-padding (clamped window) path.
    x2 = jax.random.normal(k1, (2, 3, 15, 13), dtype=jnp.float32)
    for pt in ("max_pool", "avg_pool"):
        o = jax.block_until_ready(spp_layer(x2, num_levels=3, pool_type=pt))
        r = _spp_reference(x2, num_levels=3, pool_type=pt)
        assert o.shape == (2, 3 * (1 + 4 + 9)), o.shape
        assert jnp.allclose(o, r, atol=1e-5, rtol=1e-5)

    print("KERNEL_OK")
</pallas_src>

<mosaic_0001>
module attributes {stable_mosaic.version = 11 : i64} {
  func.func @_spp_kernel(%arg0: i32, %arg1: memref<8x16x16xf32, #tpu.memory_space<vmem>>, %arg2: memref<8x1xf32, #tpu.memory_space<vmem>>, %arg3: memref<8x4xf32, #tpu.memory_space<vmem>>) attributes {dimension_semantics = [#tpu.dimension_semantics<parallel>], iteration_bounds = array<i64: 1>, scalar_prefetch = 0 : i64, scratch_operands = 0 : i64, tpu.core_type = #tpu.core_type<tc>, window_params = [{transform_indices = @transform_0, window_bounds = array<i64: 8, 16, 16>}, {transform_indices = @transform_1, window_bounds = array<i64: 8, 1>}, {transform_indices = @transform_2, window_bounds = array<i64: 8, 4>}]} {
    %c0 = arith.constant 0 : index
    %c0_0 = arith.constant 0 : index
    %c0_1 = arith.constant 0 : index
    %0 = vector.load %arg1[%c0, %c0_0, %c0_1] : memref<8x16x16xf32, #tpu.memory_space<vmem>>, vector<8x16x16xf32>
    %cst = arith.constant dense<0xFF800000> : vector<8x16xf32>
    %1 = vector.multi_reduction <maximumf>, %0, %cst [2] : vector<8x16x16xf32> to vector<8x16xf32>
    %cst_2 = arith.constant dense<0xFF800000> : vector<8xf32>
    %2 = vector.multi_reduction <maximumf>, %1, %cst_2 [1] : vector<8x16xf32> to vector<8xf32>
    %3 = vector.shape_cast %2 : vector<8xf32> to vector<8x1xf32>
    %c0_3 = arith.constant 0 : index
    %c0_4 = arith.constant 0 : index
    %4 = vector.load %arg2[%c0_3, %c0_4] : memref<8x1xf32, #tpu.memory_space<vmem>>, vector<8x1xf32>
    tpu.vector_store %arg2[%c0_3, %c0_4], %3 {strides = array<i32>} : memref<8x1xf32, #tpu.memory_space<vmem>>, vector<8x1xf32>,
    %c0_5 = arith.constant 0 : index
    %c0_6 = arith.constant 0 : index
    %c0_7 = arith.constant 0 : index
    %5 = vector.load %arg1[%c0_5, %c0_6, %c0_7] : memref<8x16x16xf32, #tpu.memory_space<vmem>>, vector<8x8x8xf32>
    %cst_8 = arith.constant dense<0xFF800000> : vector<8x8xf32>
    %6 = vector.multi_reduction <maximumf>, %5, %cst_8 [2] : vector<8x8x8xf32> to vector<8x8xf32>
    %cst_9 = arith.constant dense<0xFF800000> : vector<8xf32>
    %7 = vector.multi_reduction <maximumf>, %6, %cst_9 [1] : vector<8x8xf32> to vector<8xf32>
    %8 = vector.shape_cast %7 : vector<8xf32> to vector<8x1xf32>
    %c0_10 = arith.constant 0 : index
    %c0_11 = arith.constant 0 : index
    %9 = vector.load %arg3[%c0_10, %c0_11] : memref<8x4xf32, #tpu.memory_space<vmem>>, vector<8x1xf32>
    tpu.vector_store %arg3[%c0_10, %c0_11], %8 {strides = array<i32>} : memref<8x4xf32, #tpu.memory_space<vmem>>, vector<8x1xf32>,
    %c0_12 = arith.constant 0 : index
    %c0_13 = arith.constant 0 : index
    %c8 = arith.constant 8 : index
    %10 = vector.load %arg1[%c0_12, %c0_13, %c8] : memref<8x16x16xf32, #tpu.memory_space<vmem>>, vector<8x8x8xf32>
    %cst_14 = arith.constant dense<0xFF800000> : vector<8x8xf32>
    %11 = vector.multi_reduction <maximumf>, %10, %cst_14 [2] : vector<8x8x8xf32> to vector<8x8xf32>
    %cst_15 = arith.constant dense<0xFF800000> : vector<8xf32>
    %12 = vector.multi_reduction <maximumf>, %11, %cst_15 [1] : vector<8x8xf32> to vector<8xf32>
    %13 = vector.shape_cast %12 : vector<8xf32> to vector<8x1xf32>
    %c0_16 = arith.constant 0 : index
    %c1 = arith.constant 1 : index
    %14 = vector.load %arg3[%c0_16, %c1] : memref<8x4xf32, #tpu.memory_space<vmem>>, vector<8x1xf32>
    tpu.vector_store %arg3[%c0_16, %c1], %13 {strides = array<i32>} : memref<8x4xf32, #tpu.memory_space<vmem>>, vector<8x1xf32>,
    %c0_17 = arith.constant 0 : index
    %c8_18 = arith.constant 8 : index
    %c0_19 = arith.constant 0 : index
    %15 = vector.load %arg1[%c0_17, %c8_18, %c0_19] : memref<8x16x16xf32, #tpu.memory_space<vmem>>, vector<8x8x8xf32>
    %cst_20 = arith.constant dense<0xFF800000> : vector<8x8xf32>
    %16 = vector.multi_reduction <maximumf>, %15, %cst_20 [2] : vector<8x8x8xf32> to vector<8x8xf32>
    %cst_21 = arith.constant dense<0xFF800000> : vector<8xf32>
    %17 = vector.multi_reduction <maximumf>, %16, %cst_21 [1] : vector<8x8xf32> to vector<8xf32>
    %18 = vector.shape_cast %17 : vector<8xf32> to vector<8x1xf32>
    %c0_22 = arith.constant 0 : index
    %c2 = arith.constant 2 : index
    %19 = vector.load %arg3[%c0_22, %c2] : memref<8x4xf32, #tpu.memory_space<vmem>>, vector<8x1xf32>
    tpu.vector_store %arg3[%c0_22, %c2], %18 {strides = array<i32>} : memref<8x4xf32, #tpu.memory_space<vmem>>, vector<8x1xf32>,
    %c0_23 = arith.constant 0 : index
    %c8_24 = arith.constant 8 : index
    %c8_25 = arith.constant 8 : index
    %20 = vector.load %arg1[%c0_23, %c8_24, %c8_25] : memref<8x16x16xf32, #tpu.memory_space<vmem>>, vector<8x8x8xf32>
    %cst_26 = arith.constant dense<0xFF800000> : vector<8x8xf32>
    %21 = vector.multi_reduction <maximumf>, %20, %cst_26 [2] : vector<8x8x8xf32> to vector<8x8xf32>
    %cst_27 = arith.constant dense<0xFF800000> : vector<8xf32>
    %22 = vector.multi_reduction <maximumf>, %21, %cst_27 [1] : vector<8x8xf32> to vector<8xf32>
    %23 = vector.shape_cast %22 : vector<8xf32> to vector<8x1xf32>
    %c0_28 = arith.constant 0 : index
    %c3 = arith.constant 3 : index
    %24 = vector.load %arg3[%c0_28, %c3] : memref<8x4xf32, #tpu.memory_space<vmem>>, vector<8x1xf32>
    tpu.vector_store %arg3[%c0_28, %c3], %23 {strides = array<i32>} : memref<8x4xf32, #tpu.memory_space<vmem>>, vector<8x1xf32>,
    return
  }
  func.func @transform_0(%arg0: i32) -> (i32, i32, i32) {
    %c0_i32 = arith.constant 0 : i32
    %c0_i32_0 = arith.constant 0 : i32
    %c0_i32_1 = arith.constant 0 : i32
    return %arg0, %c0_i32, %c0_i32_0 : i32, i32, i32
  }
  func.func @transform_1(%arg0: i32) -> (i32, i32) {
    %c0_i32 = arith.constant 0 : i32
    %c0_i32_0 = arith.constant 0 : i32
    return %arg0, %c0_i32 : i32, i32
  }
  func.func @transform_2(%arg0: i32) -> (i32, i32) {
    %c0_i32 = arith.constant 0 : i32
    %c0_i32_0 = arith.constant 0 : i32
    return %arg0, %c0_i32 : i32, i32
  }
}

</mosaic_0001>

<llo_original>
// kernel: tpu_custom_call.1
$region0: #{tpu_custom_call.1}
  #allocation0 [shape = 'u32[]', space=smem, size = 0x4, offset = 0x4, fixed_abs, tag = 'smem constant byte address 0x4 - core index']
  #allocation1 [shape = 'u32[144,128]{1,0:T(1,128)}', space=vmem, size = 0x12000, scoped, tag = 'internal scratch']
  %s0 = inlined_call_operand.hbm [shape: f32[8,16,16], index: 0, kind: input, shape index: {}]
  %s1 = inlined_call_operand.vmem [shape: f32[8,1], index: 1, kind: output, shape index: {0}]
  %s2 = inlined_call_operand.vmem [shape: f32[8,4], index: 2, kind: output, shape index: {1}]
  %3 = xla_tuple %s1, %s2
  %s4 = sld [smem:[#allocation0]]
  $region26: #{tpu_custom_call.1} parent=0
    _
  %s6 = ssub.s32 1, %s4
  %s7 = scalar_select 0, %s6, %s4
  $region1: #{tpu_custom_call.1} parent=0
    #allocation2 [shape = 'u8[65536]{0}', space=vmem, size = 0x10000, scoped, tag = 'input window, operand 0, single buffered']
    #allocation3 [shape = 's32[1]{0}', space=sflag, size = 0x4, scoped, tag = 'scoped memory for tpu_custom_call.1']
    %8 = vsyncpa [#allocation3], 0
    // Predicated region
    $region2: #{tpu_custom_call.1} parent=1 // pred_check
      _
    $region3: #{tpu_custom_call.1} parent=1 // pred_check_branch
      %10 = sbr.rel (0) target = $region5
    $region4: #{tpu_custom_call.1} parent=1 // pred_region
      %s12 = ssub.s32 2048, 2048
      %13 = vsyncadd [#allocation3], %s12
      %s14 = sshll.u32 [#allocation2], 4
      %s15 = int_to_ptr.vmem [resolvable:$true] %s14
      %20 = dma.hbm_to_vmem [thread:$0]  %s0, 2048, %s15, [#allocation3], 128, 128, 8
    $region5: #{tpu_custom_call.1} parent=1 // pred_fallthru
      _
    // Predicated region
    $region6: #{tpu_custom_call.1} parent=1 // pred_check
      _
    $region7: #{tpu_custom_call.1} parent=1 // pred_check_branch
      %22 = sbr.rel (0) target = $region9
    $region8: #{tpu_custom_call.1} parent=1 // pred_region
      %23 = dma.done [#allocation3], 2048
    $region9: #{tpu_custom_call.1} parent=1 // pred_fallthru
      _
    %v24 = vld [vmem:[#allocation2] sm:$0xff]
    %v25 = vld [vmem:[#allocation2 + $0x8] sm:$0xff]
    %v26 = vld [vmem:[#allocation2 + $0x10] sm:$0xff]
    %v27 = vld [vmem:[#allocation2 + $0x18] sm:$0xff]
    %v28 = vld [vmem:[#allocation2 + $0x20] sm:$0xff]
    %v29 = vld [vmem:[#allocation2 + $0x28] sm:$0xff]
    %v30 = vld [vmem:[#allocation2 + $0x30] sm:$0xff]
    %v31 = vld [vmem:[#allocation2 + $0x38] sm:$0xff]
    %v32 = vld [vmem:[#allocation2 + $0x40] sm:$0xff]
    %v33 = vld [vmem:[#allocation2 + $0x48] sm:$0xff]
    %v34 = vld [vmem:[#allocation2 + $0x50] sm:$0xff]
    %v35 = vld [vmem:[#allocation2 + $0x58] sm:$0xff]
    %v36 = vld [vmem:[#allocation2 + $0x60] sm:$0xff]
    %v37 = vld [vmem:[#allocation2 + $0x68] sm:$0xff]
    %v38 = vld [vmem:[#allocation2 + $0x70] sm:$0xff]
    %v39 = vld [vmem:[#allocation2 + $0x78] sm:$0xff]
    %vm40 = vcmask 130048
    %v41 = vsel %vm40, %v24, -inf
    %42 = vmax.xlane.f32.xlu0 %v41
    %v43 = vpop.xlane.xlu0 %42
    %v44 = vsel %vm40, %v25, -inf
    %45 = vmax.xlane.f32.xlu0 %v44
    %v46 = vpop.xlane.xlu0 %45
    %v47 = vsel %vm40, %v26, -inf
    %48 = vmax.xlane.f32.xlu0 %v47
    %v49 = vpop.xlane.xlu0 %48
    %v50 = vsel %vm40, %v27, -inf
    %51 = vmax.xlane.f32.xlu0 %v50
    %v52 = vpop.xlane.xlu0 %51
    %v53 = vsel %vm40, %v28, -inf
    %54 = vmax.xlane.f32.xlu0 %v53
    %v55 = vpop.xlane.xlu0 %54
    %v56 = vsel %vm40, %v29, -inf
    %57 = vmax.xlane.f32.xlu0 %v56
    %v58 = vpop.xlane.xlu0 %57
    %v59 = vsel %vm40, %v30, -inf
    %60 = vmax.xlane.f32.xlu0 %v59
    %v61 = vpop.xlane.xlu0 %60
    %v62 = vsel %vm40, %v31, -inf
    %63 = vmax.xlane.f32.xlu0 %v62
    %v64 = vpop.xlane.xlu0 %63
    %v65 = vsel %vm40, %v32, -inf
    %66 = vmax.xlane.f32.xlu0 %v65
    %v67 = vpop.xlane.xlu0 %66
    %v68 = vsel %vm40, %v33, -inf
    %69 = vmax.xlane.f32.xlu0 %v68
    %v70 = vpop.xlane.xlu0 %69
    %v71 = vsel %vm40, %v34, -inf
    %72 = vmax.xlane.f32.xlu0 %v71
    %v73 = vpop.xlane.xlu0 %72
    %v74 = vsel %vm40, %v35, -inf
    %75 = vmax.xlane.f32.xlu0 %v74
    %v76 = vpop.xlane.xlu0 %75
    %v77 = vsel %vm40, %v36, -inf
    %78 = vmax.xlane.f32.xlu0 %v77
    %v79 = vpop.xlane.xlu0 %78
    %v80 = vsel %vm40, %v37, -inf
    %81 = vmax.xlane.f32.xlu0 %v80
    %v82 = vpop.xlane.xlu0 %81
    %v83 = vsel %vm40, %v38, -inf
    %84 = vmax.xlane.f32.xlu0 %v83
    %v85 = vpop.xlane.xlu0 %84
    %v86 = vsel %vm40, %v39, -inf
    %87 = vmax.xlane.f32.xlu0 %v86
    %v88 = vpop.xlane.xlu0 %87
    %v105 = vlaneseq
    %v106 = vand.u32 %v105, 127
    %v107 = vlaneseq
    %v108 = vshrl.u32 %v107, 7
    %v109 = vsub.s32 %v106, %v108
    %v110 = vrot.slane %v43, %v109
    %v111 = vadd.s32 %v106, 4294967288
    %v112 = vlaneseq
    %v113 = vshrl.u32 %v112, 7
    %v114 = vsub.s32 %v111, %v113
    %v115 = vrot.slane %v46, %v114
    %vm116 = vcmask 130112
    %v117 = vsel %vm116, %v115, %v110
    %v118 = vlaneseq
    %v119 = vshrl.u32 %v118, 7
    %v120 = vsub.s32 %v106, %v119
    %v121 = vrot.slane %v49, %v120
    %v122 = vlaneseq
    %v123 = vshrl.u32 %v122, 7
    %v124 = vsub.s32 %v111, %v123
    %v125 = vrot.slane %v52, %v124
    %v126 = vsel %vm116, %v125, %v121
    %v127 = vlaneseq
    %v128 = vshrl.u32 %v127, 7
    %v129 = vsub.s32 %v106, %v128
    %v130 = vrot.slane %v55, %v129
    %v131 = vlaneseq
    %v132 = vshrl.u32 %v131, 7
    %v133 = vsub.s32 %v111, %v132
    %v134 = vrot.slane %v58, %v133
    %v135 = vsel %vm116, %v134, %v130
    %v136 = vlaneseq
    %v137 = vshrl.u32 %v136, 7
    %v138 = vsub.s32 %v106, %v137
    %v139 = vrot.slane %v61, %v138
    %v140 = vlaneseq
    %v141 = vshrl.u32 %v140, 7
    %v142 = vsub.s32 %v111, %v141
    %v143 = vrot.slane %v64, %v142
    %v144 = vsel %vm116, %v143, %v139
    %v145 = vlaneseq
    %v146 = vshrl.u32 %v145, 7
    %v147 = vsub.s32 %v106, %v146
    %v148 = vrot.slane %v67, %v147
    %v149 = vlaneseq
    %v150 = vshrl.u32 %v149, 7
    %v151 = vsub.s32 %v111, %v150
    %v152 = vrot.slane %v70, %v151
    %v153 = vsel %vm116, %v152, %v148
    %v154 = vlaneseq
    %v155 = vshrl.u32 %v154, 7
    %v156 = vsub.s32 %v106, %v155
    %v157 = vrot.slane %v73, %v156
    %v158 = vlaneseq
    %v159 = vshrl.u32 %v158, 7
    %v160 = vsub.s32 %v111, %v159
    %v161 = vrot.slane %v76, %v160
    %v162 = vsel %vm116, %v161, %v157
    %v163 = vlaneseq
    %v164 = vshrl.u32 %v163, 7
    %v165 = vsub.s32 %v106, %v164
    %v166 = vrot.slane %v79, %v165
    %v167 = vlaneseq
    %v168 = vshrl.u32 %v167, 7
    %v169 = vsub.s32 %v111, %v168
    %v170 = vrot.slane %v82, %v169
    %v171 = vsel %vm116, %v170, %v166
    %v172 = vlaneseq
    %v173 = vshrl.u32 %v172, 7
    %v174 = vsub.s32 %v106, %v173
    %v175 = vrot.slane %v85, %v174
    %v176 = vlaneseq
    %v177 = vshrl.u32 %v176, 7
    %v178 = vsub.s32 %v111, %v177
    %v179 = vrot.slane %v88, %v178
    %v180 = vsel %vm116, %v179, %v175
    %vm181 = vcmask 1041409
    %v182 = vsel %vm181, %v126, %v117
    %vm183 = vcmask 1042434
    %v184 = vsel %vm183, %v135, %v182
    %vm185 = vcmask 1043459
    %v186 = vsel %vm185, %v144, %v184
    %vm187 = vcmask 1044484
    %v188 = vsel %vm187, %v153, %v186
    %vm189 = vcmask 1045509
    %v190 = vsel %vm189, %v162, %v188
    %vm191 = vcmask 1046534
    %v192 = vsel %vm191, %v171, %v190
    %vm193 = vcmask 1047559
    %v194 = vsel %vm193, %v180, %v192
    %v196 = vsel %vm40, %v194, -inf
    %197 = vmax.xlane.f32.xlu0 %v196
    %v198 = vpop.xlane.xlu0 %197
    %vm199 = vcmask 7168
    %200 = vst.msk [vmem:[%s1] sm:$0xff] %vm199, %v198
    %v201 = vld [vmem:[#allocation2] sm:$0xff]
    %v202 = vld [vmem:[#allocation2 + $0x10] sm:$0xff]
    %v203 = vld [vmem:[#allocation2 + $0x20] sm:$0xff]
    %v204 = vld [vmem:[#allocation2 + $0x30] sm:$0xff]
    %v205 = vld [vmem:[#allocation2 + $0x40] sm:$0xff]
    %v206 = vld [vmem:[#allocation2 + $0x50] sm:$0xff]
    %v207 = vld [vmem:[#allocation2 + $0x60] sm:$0xff]
    %v208 = vld [vmem:[#allocation2 + $0x70] sm:$0xff]
    %vm209 = vcmask 64512
    %v210 = vsel %vm209, %v201, -inf
    %211 = vmax.xlane.f32.xlu0 %v210
    %v212 = vpop.xlane.xlu0 %211
    %v213 = vsel %vm209, %v202, -inf
    %214 = vmax.xlane.f32.xlu0 %v213
    %v215 = vpop.xlane.xlu0 %214
    %v216 = vsel %vm209, %v203, -inf
    %217 = vmax.xlane.f32.xlu0 %v216
    %v218 = vpop.xlane.xlu0 %217
    %v219 = vsel %vm209, %v204, -inf
    %220 = vmax.xlane.f32.xlu0 %v219
    %v221 = vpop.xlane.xlu0 %220
    %v222 = vsel %vm209, %v205, -inf
    %223 = vmax.xlane.f32.xlu0 %v222
    %v224 = vpop.xlane.xlu0 %223
    %v225 = vsel %vm209, %v206, -inf
    %226 = vmax.xlane.f32.xlu0 %v225
    %v227 = vpop.xlane.xlu0 %226
    %v228 = vsel %vm209, %v207, -inf
    %229 = vmax.xlane.f32.xlu0 %v228
    %v230 = vpop.xlane.xlu0 %229
    %v231 = vsel %vm209, %v208, -inf
    %232 = vmax.xlane.f32.xlu0 %v231
    %v233 = vpop.xlane.xlu0 %232
    %v242 = vlaneseq
    %v243 = vshrl.u32 %v242, 7
    %v244 = vsub.s32 %v106, %v243
    %v245 = vrot.slane %v212, %v244
    %v246 = vlaneseq
    %v247 = vshrl.u32 %v246, 7
    %v248 = vsub.s32 %v106, %v247
    %v249 = vrot.slane %v215, %v248
    %v250 = vlaneseq
    %v251 = vshrl.u32 %v250, 7
    %v252 = vsub.s32 %v106, %v251
    %v253 = vrot.slane %v218, %v252
    %v254 = vlaneseq
    %v255 = vshrl.u32 %v254, 7
    %v256 = vsub.s32 %v106, %v255
    %v257 = vrot.slane %v221, %v256
    %v258 = vlaneseq
    %v259 = vshrl.u32 %v258, 7
    %v260 = vsub.s32 %v106, %v259
    %v261 = vrot.slane %v224, %v260
    %v262 = vlaneseq
    %v263 = vshrl.u32 %v262, 7
    %v264 = vsub.s32 %v106, %v263
    %v265 = vrot.slane %v227, %v264
    %v266 = vlaneseq
    %v267 = vshrl.u32 %v266, 7
    %v268 = vsub.s32 %v106, %v267
    %v269 = vrot.slane %v230, %v268
    %v270 = vlaneseq
    %v271 = vshrl.u32 %v270, 7
    %v272 = vsub.s32 %v106, %v271
    %v273 = vrot.slane %v233, %v272
    %v274 = vsel %vm181, %v249, %v245
    %v275 = vsel %vm183, %v253, %v274
    %v276 = vsel %vm185, %v257, %v275
    %v277 = vsel %vm187, %v261, %v276
    %v278 = vsel %vm189, %v265, %v277
    %v279 = vsel %vm191, %v269, %v278
    %v280 = vsel %vm193, %v273, %v279
    %v282 = vsel %vm209, %v280, -inf
    %283 = vmax.xlane.f32.xlu0 %v282
    %v284 = vpop.xlane.xlu0 %283
    %285 = vst.msk [vmem:[%s2] sm:$0xff] %vm199, %v284
    %v286 = vld [vmem:[#allocation2] sm:$0xff]
    %v287 = vld [vmem:[#allocation2 + $0x10] sm:$0xff]
    %v288 = vld [vmem:[#allocation2 + $0x20] sm:$0xff]
    %v289 = vld [vmem:[#allocation2 + $0x30] sm:$0xff]
    %v290 = vld [vmem:[#allocation2 + $0x40] sm:$0xff]
    %v291 = vld [vmem:[#allocation2 + $0x50] sm:$0xff]
    %v292 = vld [vmem:[#allocation2 + $0x60] sm:$0xff]
    %v293 = vld [vmem:[#allocation2 + $0x70] sm:$0xff]
    %v294 = vsel %vm116, %v286, -inf
    %295 = vmax.xlane.f32.xlu0 %v294
    %v296 = vpop.xlane.xlu0 %295
    %v297 = vsel %vm116, %v287, -inf
    %298 = vmax.xlane.f32.xlu0 %v297
    %v299 = vpop.xlane.xlu0 %298
    %v300 = vsel %vm116, %v288, -inf
    %301 = vmax.xlane.f32.xlu0 %v300
    %v302 = vpop.xlane.xlu0 %301
    %v303 = vsel %vm116, %v289, -inf
    %304 = vmax.xlane.f32.xlu0 %v303
    %v305 = vpop.xlane.xlu0 %304
    %v306 = vsel %vm116, %v290, -inf
    %307 = vmax.xlane.f32.xlu0 %v306
    %v308 = vpop.xlane.xlu0 %307
    %v309 = vsel %vm116, %v291, -inf
    %310 = vmax.xlane.f32.xlu0 %v309
    %v311 = vpop.xlane.xlu0 %310
    %v312 = vsel %vm116, %v292, -inf
    %313 = vmax.xlane.f32.xlu0 %v312
    %v314 = vpop.xlane.xlu0 %313
    %v315 = vsel %vm116, %v293, -inf
    %316 = vmax.xlane.f32.xlu0 %v315
    %v317 = vpop.xlane.xlu0 %316
    %v326 = vlaneseq
    %v327 = vshrl.u32 %v326, 7
    %v328 = vsub.s32 %v106, %v327
    %v329 = vrot.slane %v296, %v328
    %v330 = vlaneseq
    %v331 = vshrl.u32 %v330, 7
    %v332 = vsub.s32 %v106, %v331
    %v333 = vrot.slane %v299, %v332
    %v334 = vlaneseq
    %v335 = vshrl.u32 %v334, 7
    %v336 = vsub.s32 %v106, %v335
    %v337 = vrot.slane %v302, %v336
    %v338 = vlaneseq
    %v339 = vshrl.u32 %v338, 7
    %v340 = vsub.s32 %v106, %v339
    %v341 = vrot.slane %v305, %v340
    %v342 = vlaneseq
    %v343 = vshrl.u32 %v342, 7
    %v344 = vsub.s32 %v106, %v343
    %v345 = vrot.slane %v308, %v344
    %v346 = vlaneseq
    %v347 = vshrl.u32 %v346, 7
    %v348 = vsub.s32 %v106, %v347
    %v349 = vrot.slane %v311, %v348
    %v350 = vlaneseq
    %v351 = vshrl.u32 %v350, 7
    %v352 = vsub.s32 %v106, %v351
    %v353 = vrot.slane %v314, %v352
    %v354 = vlaneseq
    %v355 = vshrl.u32 %v354, 7
    %v356 = vsub.s32 %v106, %v355
    %v357 = vrot.slane %v317, %v356
    %v358 = vsel %vm181, %v333, %v329
    %v359 = vsel %vm183, %v337, %v358
    %v360 = vsel %vm185, %v341, %v359
    %v361 = vsel %vm187, %v345, %v360
    %v362 = vsel %vm189, %v349, %v361
    %v363 = vsel %vm191, %v353, %v362
    %v364 = vsel %vm193, %v357, %v363
    %v366 = vsel %vm209, %v364, -inf
    %367 = vmax.xlane.f32.xlu0 %v366
    %v368 = vpop.xlane.xlu0 %367
    %vm369 = vcmask 15368
    %370 = vst.msk [vmem:[%s2] sm:$0xff] %vm369, %v368
    %v371 = vld [vmem:[#allocation2 + $0x8] sm:$0xff]
    %v372 = vld [vmem:[#allocation2 + $0x18] sm:$0xff]
    %v373 = vld [vmem:[#allocation2 + $0x28] sm:$0xff]
    %v374 = vld [vmem:[#allocation2 + $0x38] sm:$0xff]
    %v375 = vld [vmem:[#allocation2 + $0x48] sm:$0xff]
    %v376 = vld [vmem:[#allocation2 + $0x58] sm:$0xff]
    %v377 = vld [vmem:[#allocation2 + $0x68] sm:$0xff]
    %v378 = vld [vmem:[#allocation2 + $0x78] sm:$0xff]
    %v379 = vsel %vm209, %v371, -inf
    %380 = vmax.xlane.f32.xlu0 %v379
    %v381 = vpop.xlane.xlu0 %380
    %v382 = vsel %vm209, %v372, -inf
    %383 = vmax.xlane.f32.xlu0 %v382
    %v384 = vpop.xlane.xlu0 %383
    %v385 = vsel %vm209, %v373, -inf
    %386 = vmax.xlane.f32.xlu0 %v385
    %v387 = vpop.xlane.xlu0 %386
    %v388 = vsel %vm209, %v374, -inf
    %389 = vmax.xlane.f32.xlu0 %v388
    %v390 = vpop.xlane.xlu0 %389
    %v391 = vsel %vm209, %v375, -inf
    %392 = vmax.xlane.f32.xlu0 %v391
    %v393 = vpop.xlane.xlu0 %392
    %v394 = vsel %vm209, %v376, -inf
    %395 = vmax.xlane.f32.xlu0 %v394
    %v396 = vpop.xlane.xlu0 %395
    %v397 = vsel %vm209, %v377, -inf
    %398 = vmax.xlane.f32.xlu0 %v397
    %v399 = vpop.xlane.xlu0 %398
    %v400 = vsel %vm209, %v378, -inf
    %401 = vmax.xlane.f32.xlu0 %v400
    %v402 = vpop.xlane.xlu0 %401
    %v411 = vlaneseq
    %v412 = vshrl.u32 %v411, 7
    %v413 = vsub.s32 %v106, %v412
    %v414 = vrot.slane %v381, %v413
    %v415 = vlaneseq
    %v416 = vshrl.u32 %v415, 7
    %v417 = vsub.s32 %v106, %v416
    %v418 = vrot.slane %v384, %v417
    %v419 = vlaneseq
    %v420 = vshrl.u32 %v419, 7
    %v421 = vsub.s32 %v106, %v420
    %v422 = vrot.slane %v387, %v421
    %v423 = vlaneseq
    %v424 = vshrl.u32 %v423, 7
    %v425 = vsub.s32 %v106, %v424
    %v426 = vrot.slane %v390, %v425
    %v427 = vlaneseq
    %v428 = vshrl.u32 %v427, 7
    %v429 = vsub.s32 %v106, %v428
    %v430 = vrot.slane %v393, %v429
    %v431 = vlaneseq
    %v432 = vshrl.u32 %v431, 7
    %v433 = vsub.s32 %v106, %v432
    %v434 = vrot.slane %v396, %v433
    %v435 = vlaneseq
    %v436 = vshrl.u32 %v435, 7
    %v437 = vsub.s32 %v106, %v436
    %v438 = vrot.slane %v399, %v437
    %v439 = vlaneseq
    %v440 = vshrl.u32 %v439, 7
    %v441 = vsub.s32 %v106, %v440
    %v442 = vrot.slane %v402, %v441
    %v443 = vsel %vm181, %v418, %v414
    %v444 = vsel %vm183, %v422, %v443
    %v445 = vsel %vm185, %v426, %v444
    %v446 = vsel %vm187, %v430, %v445
    %v447 = vsel %vm189, %v434, %v446
    %v448 = vsel %vm191, %v438, %v447
    %v449 = vsel %vm193, %v442, %v448
    %v451 = vsel %vm209, %v449, -inf
    %452 = vmax.xlane.f32.xlu0 %v451
    %v453 = vpop.xlane.xlu0 %452
    %vm454 = vcmask 23568
    %455 = vst.msk [vmem:[%s2] sm:$0xff] %vm454, %v453
    %v456 = vld [vmem:[#allocation2 + $0x8] sm:$0xff]
    %v457 = vld [vmem:[#allocation2 + $0x18] sm:$0xff]
    %v458 = vld [vmem:[#allocation2 + $0x28] sm:$0xff]
    %v459 = vld [vmem:[#allocation2 + $0x38] sm:$0xff]
    %v460 = vld [vmem:[#allocation2 + $0x48] sm:$0xff]
    %v461 = vld [vmem:[#allocation2 + $0x58] sm:$0xff]
    %v462 = vld [vmem:[#allocation2 + $0x68] sm:$0xff]
    %v463 = vld [vmem:[#allocation2 + $0x78] sm:$0xff]
    %v464 = vsel %vm116, %v456, -inf
    %465 = vmax.xlane.f32.xlu0 %v464
    %v466 = vpop.xlane.xlu0 %465
    %v467 = vsel %vm116, %v457, -inf
    %468 = vmax.xlane.f32.xlu0 %v467
    %v469 = vpop.xlane.xlu0 %468
    %v470 = vsel %vm116, %v458, -inf
    %471 = vmax.xlane.f32.xlu0 %v470
    %v472 = vpop.xlane.xlu0 %471
    %v473 = vsel %vm116, %v459, -inf
    %474 = vmax.xlane.f32.xlu0 %v473
    %v475 = vpop.xlane.xlu0 %474
    %v476 = vsel %vm116, %v460, -inf
    %477 = vmax.xlane.f32.xlu0 %v476
    %v478 = vpop.xlane.xlu0 %477
    %v479 = vsel %vm116, %v461, -inf
    %480 = vmax.xlane.f32.xlu0 %v479
    %v481 = vpop.xlane.xlu0 %480
    %v482 = vsel %vm116, %v462, -inf
    %483 = vmax.xlane.f32.xlu0 %v482
    %v484 = vpop.xlane.xlu0 %483
    %v485 = vsel %vm116, %v463, -inf
    %486 = vmax.xlane.f32.xlu0 %v485
    %v487 = vpop.xlane.xlu0 %486
    %v496 = vlaneseq
    %v497 = vshrl.u32 %v496, 7
    %v498 = vsub.s32 %v106, %v497
    %v499 = vrot.slane %v466, %v498
    %v500 = vlaneseq
    %v501 = vshrl.u32 %v500, 7
    %v502 = vsub.s32 %v106, %v501
    %v503 = vrot.slane %v469, %v502
    %v504 = vlaneseq
    %v505 = vshrl.u32 %v504, 7
    %v506 = vsub.s32 %v106, %v505
    %v507 = vrot.slane %v472, %v506
    %v508 = vlaneseq
    %v509 = vshrl.u32 %v508, 7
    %v510 = vsub.s32 %v106, %v509
    %v511 = vrot.slane %v475, %v510
    %v512 = vlaneseq
    %v513 = vshrl.u32 %v512, 7
    %v514 = vsub.s32 %v106, %v513
    %v515 = vrot.slane %v478, %v514
    %v516 = vlaneseq
    %v517 = vshrl.u32 %v516, 7
    %v518 = vsub.s32 %v106, %v517
    %v519 = vrot.slane %v481, %v518
    %v520 = vlaneseq
    %v521 = vshrl.u32 %v520, 7
    %v522 = vsub.s32 %v106, %v521
    %v523 = vrot.slane %v484, %v522
    %v524 = vlaneseq
    %v525 = vshrl.u32 %v524, 7
    %v526 = vsub.s32 %v106, %v525
    %v527 = vrot.slane %v487, %v526
    %v528 = vsel %vm181, %v503, %v499
    %v529 = vsel %vm183, %v507, %v528
    %v530 = vsel %vm185, %v511, %v529
    %v531 = vsel %vm187, %v515, %v530
    %v532 = vsel %vm189, %v519, %v531
    %v533 = vsel %vm191, %v523, %v532
    %v534 = vsel %vm193, %v527, %v533
    %v536 = vsel %vm209, %v534, -inf
    %537 = vmax.xlane.f32.xlu0 %v536
    %v538 = vpop.xlane.xlu0 %537
    %vm539 = vcmask 31768
    %540 = vst.msk [vmem:[%s2] sm:$0xff] %vm539, %v538
    // Predicated region
    $region10: #{tpu_custom_call.1} parent=1 // pred_check
      _
    $region11: #{tpu_custom_call.1} parent=1 // pred_check_branch
      %542 = sbr.rel (0) target = $region13
    $region12: #{tpu_custom_call.1} parent=1 // pred_region
      _
    $region13: #{tpu_custom_call.1} parent=1 // pred_fallthru
      _
    // Predicated region
    $region14: #{tpu_custom_call.1} parent=1 // pred_check
      _
    $region15: #{tpu_custom_call.1} parent=1 // pred_check_branch
      %544 = sbr.rel (0) target = $region17
    $region16: #{tpu_custom_call.1} parent=1 // pred_region
      _
    $region17: #{tpu_custom_call.1} parent=1 // pred_fallthru
      _
    // Predicated region
    $region18: #{tpu_custom_call.1} parent=1 // pred_check
      _
    $region19: #{tpu_custom_call.1} parent=1 // pred_check_branch
      %546 = sbr.rel (0) target = $region21
    $region20: #{tpu_custom_call.1} parent=1 // pred_region
      _
    $region21: #{tpu_custom_call.1} parent=1 // pred_fallthru
      _
    // Predicated region
    $region22: #{tpu_custom_call.1} parent=1 // pred_check
      _
    $region23: #{tpu_custom_call.1} parent=1 // pred_check_branch
      %548 = sbr.rel (0) target = $region25
    $region24: #{tpu_custom_call.1} parent=1 // pred_region
      _
    $region25: #{tpu_custom_call.1} parent=1 // pred_fallthru
      _
    %549 = vsyncpa [#allocation3], 1

</llo_original>
